<compile_context>
chip_gen: v6e
topology: v6e:2x2x1
jax: 0.10.0
libtpu: 0.0.40
codegen_flags: <defaults>
</compile_context>

<pallas_src>
import jax
import jax.numpy as jnp
from jax.experimental import pallas as pl
from jax.experimental.pallas import tpu as pltpu

# ----------------------------------------------------------------------------
# Model hyper-parameters (from Region.py)
# ----------------------------------------------------------------------------
INPUT_DIM = 12
HIDDEN_DIM = 64
# TODO(synk): output_dim in the original script comes from the number of unique
# 'Cell Type em' values in a CSV we cannot read; use a fixed deterministic value.
OUTPUT_DIM = 14

PAD_DIM = 128          # lane-dense activation / weight width
NUM_LINEAR = 8         # 3 conv MLPs (2 linears each) + 2-layer fc head
ROW_ALIGN = 256        # pad N to a multiple of this (fills MXU contraction depth)
TILE_M = 256           # dst-node row block per grid step


def _round_up(x, m):
    return ((x + m - 1) // m) * m


# ----------------------------------------------------------------------------
# Per-layer Pallas kernel: one GINConv (optionally fused with the fc head),
# computed for one TILE_M block of destination rows.
# ----------------------------------------------------------------------------
def _make_gin_layer_kernel(w_idx: int, fuse_head: bool):
    def kernel(a_ref, h_ref, w_ref, b_ref, out_ref):
        tile_m = out_ref.shape[0]
        row0 = pl.multiple_of(pl.program_id(0) * tile_m, tile_m)

        # int8 adjacency row block -> bf16 MXU operand (cast lands in VALU slots
        # that have slack while MXU/DMA are busy; f32 hop keeps lowering simple).
        a_blk = a_ref[...].astype(jnp.float32).astype(jnp.bfloat16)   # (tile_m, n_pad)
        h16 = h_ref[...].astype(jnp.bfloat16)                         # (n_pad, 128)

        # Neighbor sum for this dst-row block, plus self term (eps = 0).
        agg = jnp.dot(a_blk, h16, preferred_element_type=jnp.float32)  # (tile_m, 128) f32
        z = h_ref[pl.ds(row0, tile_m), :] + agg                        # f32 self term

        biases = b_ref[...]                                            # (8, 128) f32

        def linear(h, idx):
            # Static, lane-tile-aligned slice of the packed weight slab.
            w = w_ref[idx * PAD_DIM:(idx + 1) * PAD_DIM, :]            # (128, 128) bf16
            y = jnp.dot(h.astype(jnp.bfloat16), w,
                        preferred_element_type=jnp.float32)            # MXU, f32 accum
            return y + biases[idx:idx + 1, :]

        def mlp(h, idx):
            return linear(jnp.maximum(linear(h, idx), 0.0), idx + 1)

        out = mlp(z, w_idx)            # conv MLP
        if fuse_head:
            out = mlp(out, 6)          # fc head fused into the conv3 call
        out_ref[...] = out.astype(out_ref.dtype)                       # lane-dense store

    return kernel


def _gin_layer(a_i8, h, w_slab, b_slab, *, w_idx, fuse_head, out_dtype, tile_m):
    n_pad = a_i8.shape[0]
    grid = (n_pad // tile_m,)

    in_specs = [
        pl.BlockSpec((tile_m, n_pad), lambda i: (i, 0)),                 # stream A row blocks
        pl.BlockSpec((n_pad, PAD_DIM), lambda i: (0, 0)),                # full h, resident
        pl.BlockSpec((NUM_LINEAR * PAD_DIM, PAD_DIM), lambda i: (0, 0)),  # weight slab, resident
        pl.BlockSpec((NUM_LINEAR, PAD_DIM), lambda i: (0, 0)),           # bias slab, resident
    ]
    out_spec = pl.BlockSpec((tile_m, PAD_DIM), lambda i: (i, 0))

    # VMEM budget (double-buffered blocks); clamped below v7x's 64 MiB physical VMEM.
    out_bytes = jnp.dtype(out_dtype).itemsize
    vmem_bytes = (2 * tile_m * n_pad * 1                        # A block (int8)
                  + 2 * n_pad * PAD_DIM * 4                     # h (f32)
                  + 2 * NUM_LINEAR * PAD_DIM * PAD_DIM * 2      # w slab (bf16)
                  + 2 * NUM_LINEAR * PAD_DIM * 4                # b slab (f32)
                  + 2 * tile_m * PAD_DIM * out_bytes)           # out block
    vmem_limit = int(min(max(vmem_bytes * 3 // 2, 16 * 1024 * 1024), 56 * 1024 * 1024))

    return pl.pallas_call(
        _make_gin_layer_kernel(w_idx, fuse_head),
        out_shape=jax.ShapeDtypeStruct((n_pad, PAD_DIM), out_dtype),
        grid=grid,
        in_specs=in_specs,
        out_specs=out_spec,
        compiler_params=pltpu.CompilerParams(
            # dst-row blocks are independent: megacore sharding on v7x, no-op on v5e/v6e.
            dimension_semantics=("parallel",),
            vmem_limit_bytes=vmem_limit,
        ),
    )(a_i8, h, w_slab, b_slab)


# ----------------------------------------------------------------------------
# Parameter packing
# ----------------------------------------------------------------------------
def pack_params(params):
    """Pack 8 (in,out) weights + biases into two padded slabs."""
    order = [("w11", "b11"), ("w12", "b12"), ("w21", "b21"), ("w22", "b22"),
             ("w31", "b31"), ("w32", "b32"), ("wf1", "bf1"), ("wf2", "bf2")]
    w_blocks, b_rows = [], []
    for wn, bn in order:
        w = params[wn]
        b = params[bn].reshape(-1)
        assert w.shape[0] <= PAD_DIM and w.shape[1] <= PAD_DIM
        wb = jnp.zeros((PAD_DIM, PAD_DIM), jnp.float32).at[:w.shape[0], :w.shape[1]].set(w)
        bb = jnp.zeros((PAD_DIM,), jnp.float32).at[:b.shape[0]].set(b)
        w_blocks.append(wb)
        b_rows.append(bb)
    w_slab = jnp.concatenate(w_blocks, axis=0).astype(jnp.bfloat16)   # (8*128, 128)
    b_slab = jnp.stack(b_rows, axis=0)                                # (8, 128) f32
    return w_slab, b_slab


# ----------------------------------------------------------------------------
# Wrapper: full GINModel forward
# ----------------------------------------------------------------------------
def gin_model_forward(x, edge_index, params):
    """x: (N, INPUT_DIM) f32; edge_index: (2, E) int32; params: dict of arrays."""
    n = x.shape[0]
    n_pad = max(_round_up(n, ROW_ALIGN), ROW_ALIGN)
    tile_m = min(TILE_M, n_pad)

    # Lane-dense, row-padded node features.
    x_pad = jnp.zeros((n_pad, PAD_DIM), jnp.float32).at[:n, :x.shape[1]].set(x)

    # Dense adjacency A[dst, src] += 1 (GIN sum over incoming edges), stored int8.
    # 0/1 adjacency is exact in int8/bf16; multigraph counts > 127 would overflow.
    src, dst = edge_index[0], edge_index[1]
    a_i8 = (jnp.zeros((n_pad, n_pad), jnp.int32)
            .at[dst, src].add(1)
            .astype(jnp.int8))

    w_slab, b_slab = pack_params(params)

    h = _gin_layer(a_i8, x_pad, w_slab, b_slab, w_idx=0, fuse_head=False,
                   out_dtype=jnp.float32, tile_m=tile_m)     # conv1
    h = _gin_layer(a_i8, h, w_slab, b_slab, w_idx=2, fuse_head=False,
                   out_dtype=jnp.float32, tile_m=tile_m)     # conv2
    out = _gin_layer(a_i8, h, w_slab, b_slab, w_idx=4, fuse_head=True,
                     out_dtype=jnp.bfloat16, tile_m=tile_m)  # conv3 + fc head fused

    # Slice back to the real contract: (N, OUTPUT_DIM). Padded rows carry
    # bias-propagated garbage and must never be read directly.
    return out[:n, :OUTPUT_DIM].astype(jnp.float32)


def init_params(key):
    """Deterministic parameter init. Linear weights stored as (in, out)."""
    def lin(k, fan_in, fan_out):
        kw, kb = jax.random.split(k)
        bound = 1.0 / jnp.sqrt(fan_in)
        w = jax.random.uniform(kw, (fan_in, fan_out), jnp.float32, -bound, bound)
        b = jax.random.uniform(kb, (fan_out,), jnp.float32, -bound, bound)
        return w, b

    keys = jax.random.split(key, 8)
    p = {}
    p["w11"], p["b11"] = lin(keys[0], INPUT_DIM, HIDDEN_DIM)
    p["w12"], p["b12"] = lin(keys[1], HIDDEN_DIM, HIDDEN_DIM)
    p["w21"], p["b21"] = lin(keys[2], HIDDEN_DIM, HIDDEN_DIM)
    p["w22"], p["b22"] = lin(keys[3], HIDDEN_DIM, HIDDEN_DIM)
    p["w31"], p["b31"] = lin(keys[4], HIDDEN_DIM, HIDDEN_DIM)
    p["w32"], p["b32"] = lin(keys[5], HIDDEN_DIM, HIDDEN_DIM)
    p["wf1"], p["bf1"] = lin(keys[6], HIDDEN_DIM, HIDDEN_DIM)
    p["wf2"], p["bf2"] = lin(keys[7], HIDDEN_DIM, OUTPUT_DIM)
    return p


def reference_forward(x, edge_index, params):
    """Pure-JAX reference mirroring torch_geometric GINConv (eps=0) with the
    same bf16-operand / f32-accumulate matmul numerics as the kernel."""
    n = x.shape[0]
    a = jnp.zeros((n, n), jnp.float32).at[edge_index[1], edge_index[0]].add(1.0)
    a16 = a.astype(jnp.bfloat16)

    def dot16(p, q):
        return jnp.dot(p.astype(jnp.bfloat16), q.astype(jnp.bfloat16),
                       preferred_element_type=jnp.float32)

    def mlp(h, w1, b1, w2, b2):
        return dot16(jnp.maximum(dot16(h, w1) + b1, 0.0), w2) + b2

    def conv(h, w1, b1, w2, b2):
        agg = jnp.dot(a16, h.astype(jnp.bfloat16), preferred_element_type=jnp.float32)
        return mlp(h + agg, w1, b1, w2, b2)

    h = conv(x, params["w11"], params["b11"], params["w12"], params["b12"])
    h = conv(h, params["w21"], params["b21"], params["w22"], params["b22"])
    h = conv(h, params["w31"], params["b31"], params["w32"], params["b32"])
    return mlp(h, params["wf1"], params["bf1"], params["wf2"], params["bf2"])


if __name__ == "__main__":
    key = jax.random.PRNGKey(0)
    k_x, k_p = jax.random.split(key)

    N_NODES = 8
    # Node features
    x = jax.random.normal(k_x, (N_NODES, INPUT_DIM), jnp.float32)
    # Deterministic ring graph (both directions), shape (2, E)
    src = jnp.arange(N_NODES, dtype=jnp.int32)
    dst = (src + 1) % N_NODES
    edge_index = jnp.concatenate(
        [jnp.stack([src, dst]), jnp.stack([dst, src])], axis=1
    )  # (2, 16)

    params = init_params(k_p)

    out = gin_model_forward(x, edge_index, params)
    out = jax.block_until_ready(out)

    ref = reference_forward(x, edge_index, params)
    # Kernel writes the final slab as bf16 (halved writeback); round the f32
    # reference through bf16 at the same point before comparing.
    ref_rounded = ref.astype(jnp.bfloat16).astype(jnp.float32)
    assert out.shape == (N_NODES, OUTPUT_DIM)
    assert jnp.allclose(out, ref_rounded, atol=1e-2, rtol=1e-2), float(
        jnp.max(jnp.abs(out - ref_rounded)))

    print("KERNEL_OK")
</pallas_src>

<mosaic_0001>
module attributes {stable_mosaic.version = 11 : i64} {
  func.func @kernel(%arg0: i32, %arg1: memref<256x256xi8, #tpu.memory_space<vmem>>, %arg2: memref<256x128xf32, #tpu.memory_space<vmem>>, %arg3: memref<1024x128xbf16, #tpu.memory_space<vmem>>, %arg4: memref<8x128xf32, #tpu.memory_space<vmem>>, %arg5: memref<256x128xf32, #tpu.memory_space<vmem>>) attributes {dimension_semantics = [#tpu.dimension_semantics<parallel>], iteration_bounds = array<i64: 1>, scalar_prefetch = 0 : i64, scratch_operands = 0 : i64, tpu.core_type = #tpu.core_type<tc>, window_params = [{transform_indices = @transform_0, window_bounds = array<i64: 256, 256>}, {pipeline_mode = #tpu.pipeline_mode<synchronous>, transform_indices = @transform_1, window_bounds = array<i64: 256, 128>}, {pipeline_mode = #tpu.pipeline_mode<synchronous>, transform_indices = @transform_2, window_bounds = array<i64: 1024, 128>}, {pipeline_mode = #tpu.pipeline_mode<synchronous>, transform_indices = @transform_3, window_bounds = array<i64: 8, 128>}, {transform_indices = @transform_4, window_bounds = array<i64: 256, 128>}]} {
    %c256_i32 = arith.constant 256 : i32
    %0 = arith.muli %arg0, %c256_i32 : i32
    %1 = tpu.assume_multiple %0, 256 : i32
    %c0 = arith.constant 0 : index
    %c0_0 = arith.constant 0 : index
    %2 = vector.load %arg1[%c0, %c0_0] : memref<256x256xi8, #tpu.memory_space<vmem>>, vector<256x256xi8>
    %3 = arith.sitofp %2 : vector<256x256xi8> to vector<256x256xf32>
    %4 = arith.truncf %3 : vector<256x256xf32> to vector<256x256xbf16>
    %c0_1 = arith.constant 0 : index
    %c0_2 = arith.constant 0 : index
    %5 = vector.load %arg2[%c0_1, %c0_2] : memref<256x128xf32, #tpu.memory_space<vmem>>, vector<256x128xf32>
    %6 = arith.truncf %5 : vector<256x128xf32> to vector<256x128xbf16>
    %cst = arith.constant dense<0.000000e+00> : vector<256x128xf32>
    %7 = tpu.matmul %4, %6, %cst {dimension_numbers = #tpu.dot_dimension_numbers<[1], [0], [0], [1], [0, 0, 1, 1], [], []>} : vector<256x256xbf16>, vector<256x128xbf16>, vector<256x128xf32> -> vector<256x128xf32>
    %8 = arith.index_cast %1 : i32 to index
    %c0_3 = arith.constant 0 : index
    %9 = vector.load %arg2[%8, %c0_3] : memref<256x128xf32, #tpu.memory_space<vmem>>, vector<256x128xf32>
    %10 = arith.addf %9, %7 : vector<256x128xf32>
    %c0_4 = arith.constant 0 : index
    %c0_5 = arith.constant 0 : index
    %11 = vector.load %arg4[%c0_4, %c0_5] : memref<8x128xf32, #tpu.memory_space<vmem>>, vector<8x128xf32>
    %c0_6 = arith.constant 0 : index
    %c0_7 = arith.constant 0 : index
    %12 = vector.load %arg3[%c0_6, %c0_7] : memref<1024x128xbf16, #tpu.memory_space<vmem>>, vector<128x128xbf16>
    %13 = arith.truncf %10 : vector<256x128xf32> to vector<256x128xbf16>
    %cst_8 = arith.constant dense<0.000000e+00> : vector<256x128xf32>
    %14 = tpu.matmul %13, %12, %cst_8 {dimension_numbers = #tpu.dot_dimension_numbers<[1], [0], [0], [1], [0, 0, 1, 1], [], []>} : vector<256x128xbf16>, vector<128x128xbf16>, vector<256x128xf32> -> vector<256x128xf32>
    %15 = vector.extract_strided_slice %11 {offsets = [0, 0], sizes = [1, 128], strides = [1, 1]} : vector<8x128xf32> to vector<1x128xf32>
    %16 = vector.broadcast %15 : vector<1x128xf32> to vector<256x128xf32>
    %17 = arith.addf %14, %16 : vector<256x128xf32>
    %cst_9 = arith.constant 0.000000e+00 : f32
    %18 = vector.broadcast %cst_9 : f32 to vector<256x128xf32>
    %19 = arith.maximumf %17, %18 : vector<256x128xf32>
    %c128 = arith.constant 128 : index
    %c0_10 = arith.constant 0 : index
    %20 = vector.load %arg3[%c128, %c0_10] : memref<1024x128xbf16, #tpu.memory_space<vmem>>, vector<128x128xbf16>
    %21 = arith.truncf %19 : vector<256x128xf32> to vector<256x128xbf16>
    %cst_11 = arith.constant dense<0.000000e+00> : vector<256x128xf32>
    %22 = tpu.matmul %21, %20, %cst_11 {dimension_numbers = #tpu.dot_dimension_numbers<[1], [0], [0], [1], [0, 0, 1, 1], [], []>} : vector<256x128xbf16>, vector<128x128xbf16>, vector<256x128xf32> -> vector<256x128xf32>
    %23 = vector.extract_strided_slice %11 {offsets = [1, 0], sizes = [1, 128], strides = [1, 1]} : vector<8x128xf32> to vector<1x128xf32>
    %24 = vector.broadcast %23 : vector<1x128xf32> to vector<256x128xf32>
    %25 = arith.addf %22, %24 : vector<256x128xf32>
    %c0_12 = arith.constant 0 : index
    %c0_13 = arith.constant 0 : index
    %26 = vector.load %arg5[%c0_12, %c0_13] : memref<256x128xf32, #tpu.memory_space<vmem>>, vector<256x128xf32>
    tpu.vector_store %arg5[%c0_12, %c0_13], %25 {strides = array<i32>} : memref<256x128xf32, #tpu.memory_space<vmem>>, vector<256x128xf32>,
    return
  }
  func.func @transform_0(%arg0: i32) -> (i32, i32) {
    %c0_i32 = arith.constant 0 : i32
    %c0_i32_0 = arith.constant 0 : i32
    return %arg0, %c0_i32 : i32, i32
  }
  func.func @transform_1(%arg0: i32) -> (i32, i32) {
    %c0_i32 = arith.constant 0 : i32
    %c0_i32_0 = arith.constant 0 : i32
    %c0_i32_1 = arith.constant 0 : i32
    return %c0_i32, %c0_i32_0 : i32, i32
  }
  func.func @transform_2(%arg0: i32) -> (i32, i32) {
    %c0_i32 = arith.constant 0 : i32
    %c0_i32_0 = arith.constant 0 : i32
    %c0_i32_1 = arith.constant 0 : i32
    return %c0_i32, %c0_i32_0 : i32, i32
  }
  func.func @transform_3(%arg0: i32) -> (i32, i32) {
    %c0_i32 = arith.constant 0 : i32
    %c0_i32_0 = arith.constant 0 : i32
    %c0_i32_1 = arith.constant 0 : i32
    return %c0_i32, %c0_i32_0 : i32, i32
  }
  func.func @transform_4(%arg0: i32) -> (i32, i32) {
    %c0_i32 = arith.constant 0 : i32
    %c0_i32_0 = arith.constant 0 : i32
    return %arg0, %c0_i32 : i32, i32
  }
}

</mosaic_0001>

<llo_original>
// kernel: tpu_custom_call.1
$region0: #{tpu_custom_call.1}
  #allocation0 [shape = 'u32[]', space=smem, size = 0x4, offset = 0x4, fixed_abs, tag = 'smem constant byte address 0x4 - core index']
  #allocation1 [shape = 'u32[144,128]{1,0:T(1,128)}', space=vmem, size = 0x12000, scoped, tag = 'internal scratch']
  %s0 = inlined_call_operand.hbm [shape: s8[256,256], index: 0, kind: input, shape index: {}]
  %s1 = inlined_call_operand.hbm [shape: f32[256,128], index: 1, kind: input, shape index: {}]
  %s2 = inlined_call_operand.hbm [shape: bf16[1024,128], index: 2, kind: input, shape index: {}]
  %s3 = inlined_call_operand.hbm [shape: f32[8,128], index: 3, kind: input, shape index: {}]
  %s4 = inlined_call_operand.hbm [shape: f32[256,128], index: 4, kind: output, shape index: {}]
  %s5 = sld [smem:[#allocation0]]
  $region42: #{tpu_custom_call.1} parent=0
    _
  %s7 = ssub.s32 1, %s5
  %s8 = scalar_select 0, %s7, %s5
  $region1: #{tpu_custom_call.1} parent=0
    #allocation2 [shape = 'u8[65536]{0}', space=vmem, size = 0x10000, scoped, tag = 'input window, operand 0, single buffered']
    #allocation3 [shape = 's32[1]{0}', space=sflag, size = 0x4, scoped, tag = 'scoped memory for tpu_custom_call.1']
    #allocation4 [shape = 's32[1]{0}', space=sflag, size = 0x4, scoped, tag = 'scoped memory for tpu_custom_call.1']
    #allocation5 [shape = 'u8[131072]{0}', space=vmem, size = 0x20000, scoped, tag = 'input window, operand 1, single buffered']
    #allocation6 [shape = 's32[1]{0}', space=sflag, size = 0x4, scoped, tag = 'scoped memory for tpu_custom_call.1']
    #allocation7 [shape = 'u8[262144]{0}', space=vmem, size = 0x40000, scoped, tag = 'input window, operand 2, single buffered']
    #allocation8 [shape = 'u8[4096]{0}', space=vmem, size = 0x1000, scoped, tag = 'input window, operand 3, single buffered']
    #allocation9 [shape = 's32[1]{0}', space=sflag, size = 0x4, scoped, tag = 'scoped memory for tpu_custom_call.1']
    #allocation10 [shape = 'u8[131072]{0}', space=vmem, size = 0x20000, scoped, tag = 'output window, operand 0, single buffered']
    %9 = vsyncpa [#allocation3], 0
    %10 = vsyncpa [#allocation6], 0
    %11 = vsyncpa [#allocation9], 0
    %12 = vsyncpa [#allocation4], 0
    // Predicated region
    $region2: #{tpu_custom_call.1} parent=1 // pred_check
      _
    $region3: #{tpu_custom_call.1} parent=1 // pred_check_branch
      %14 = sbr.rel (0) target = $region5
    $region4: #{tpu_custom_call.1} parent=1 // pred_region
      %s16 = ssub.s32 2048, 2048
      %17 = vsyncadd [#allocation3], %s16
      %s18 = sshll.u32 [#allocation2], 4
      %s19 = int_to_ptr.vmem [resolvable:$true] %s18
      %24 = dma.hbm_to_vmem [thread:$0]  %s0, 2048, %s19, [#allocation3], 256, 256, 16
    $region5: #{tpu_custom_call.1} parent=1 // pred_fallthru
      _
    // Predicated region
    $region6: #{tpu_custom_call.1} parent=1 // pred_check
      _
    $region7: #{tpu_custom_call.1} parent=1 // pred_check_branch
      %26 = sbr.rel (0) target = $region9
    $region8: #{tpu_custom_call.1} parent=1 // pred_region
      %s28 = ssub.s32 4096, 4096
      %29 = vsyncadd [#allocation6], %s28
      %s30 = sshll.u32 [#allocation5], 4
      %s31 = int_to_ptr.vmem [resolvable:$true] %s30
      %36 = dma.hbm_to_vmem [thread:$0]  %s1, 4096, %s31, [#allocation6], 128, 128, 8
    $region9: #{tpu_custom_call.1} parent=1 // pred_fallthru
      _
    // Predicated region
    $region10: #{tpu_custom_call.1} parent=1 // pred_check
      _
    $region11: #{tpu_custom_call.1} parent=1 // pred_check_branch
      %38 = sbr.rel (0) target = $region13
    $region12: #{tpu_custom_call.1} parent=1 // pred_region
      %s40 = ssub.s32 8192, 8192
      %41 = vsyncadd [#allocation6], %s40
      %s42 = sshll.u32 [#allocation7], 4
      %s43 = int_to_ptr.vmem [resolvable:$true] %s42
      %48 = dma.hbm_to_vmem [thread:$0]  %s2, 8192, %s43, [#allocation6], 64, 64, 4
    $region13: #{tpu_custom_call.1} parent=1 // pred_fallthru
      _
    // Predicated region
    $region14: #{tpu_custom_call.1} parent=1 // pred_check
      _
    $region15: #{tpu_custom_call.1} parent=1 // pred_check_branch
      %50 = sbr.rel (0) target = $region17
    $region16: #{tpu_custom_call.1} parent=1 // pred_region
      %s52 = ssub.s32 128, 128
      %53 = vsyncadd [#allocation9], %s52
      %s55 = sshll.u32 [#allocation8], 4
      %s56 = int_to_ptr.vmem [resolvable:$true] %s55
      %58 = dma.hbm_to_vmem [thread:$0]  %s3, 128, %s56, [#allocation9]
    $region17: #{tpu_custom_call.1} parent=1 // pred_fallthru
      _
    // Predicated region
    $region18: #{tpu_custom_call.1} parent=1 // pred_check
      _
    $region19: #{tpu_custom_call.1} parent=1 // pred_check_branch
      %60 = sbr.rel (0) target = $region21
    $region20: #{tpu_custom_call.1} parent=1 // pred_region
      %61 = dma.done [#allocation3], 2048
    $region21: #{tpu_custom_call.1} parent=1 // pred_fallthru
      _
    // Predicated region
    $region22: #{tpu_custom_call.1} parent=1 // pred_check
      _
    $region23: #{tpu_custom_call.1} parent=1 // pred_check_branch
      %63 = sbr.rel (0) target = $region25
    $region24: #{tpu_custom_call.1} parent=1 // pred_region
      %64 = dma.done [#allocation6], 4096
    $region25: #{tpu_custom_call.1} parent=1 // pred_fallthru
      _
    // Predicated region
    $region26: #{tpu_custom_call.1} parent=1 // pred_check
      _
    $region27: #{tpu_custom_call.1} parent=1 // pred_check_branch
      %66 = sbr.rel (0) target = $region29
    $region28: #{tpu_custom_call.1} parent=1 // pred_region
      %67 = dma.done [#allocation6], 8192
    $region29: #{tpu_custom_call.1} parent=1 // pred_fallthru
      _
    // Predicated region
    $region30: #{tpu_custom_call.1} parent=1 // pred_check
      _
    $region31: #{tpu_custom_call.1} parent=1 // pred_check_branch
      %69 = sbr.rel (0) target = $region33
    $region32: #{tpu_custom_call.1} parent=1 // pred_region
      %70 = dma.done [#allocation9], 128
    $region33: #{tpu_custom_call.1} parent=1 // pred_fallthru
      _
    %s72 = smul.u32 0, 256
    %v73 = vld [vmem:[#allocation2] sm:$0xff]
    %v74 = vld [vmem:[#allocation2 + $0x8] sm:$0xff]
    %v75 = vld [vmem:[#allocation2 + $0x10] sm:$0xff]
    %v76 = vld [vmem:[#allocation2 + $0x18] sm:$0xff]
    %v77 = vld [vmem:[#allocation2 + $0x20] sm:$0xff]
    %v78 = vld [vmem:[#allocation2 + $0x28] sm:$0xff]
    %v79 = vld [vmem:[#allocation2 + $0x30] sm:$0xff]
    %v80 = vld [vmem:[#allocation2 + $0x38] sm:$0xff]
    %v81 = vld [vmem:[#allocation2 + $0x40] sm:$0xff]
    %v82 = vld [vmem:[#allocation2 + $0x48] sm:$0xff]
    %v83 = vld [vmem:[#allocation2 + $0x50] sm:$0xff]
    %v84 = vld [vmem:[#allocation2 + $0x58] sm:$0xff]
    %v85 = vld [vmem:[#allocation2 + $0x60] sm:$0xff]
    %v86 = vld [vmem:[#allocation2 + $0x68] sm:$0xff]
    %v87 = vld [vmem:[#allocation2 + $0x70] sm:$0xff]
    %v88 = vld [vmem:[#allocation2 + $0x78] sm:$0xff]
    %v89 = vunpack.c.l.s8.bf16 %v73
    %v90 = vunpack.c.l.s8.bf16 %v74
    %v91 = vunpack.c.h.s8.bf16 %v73
    %v92 = vunpack.c.h.s8.bf16 %v74
    %v93 = vunpack.c.l.s8.bf16 %v75
    %v94 = vunpack.c.l.s8.bf16 %v76
    %v95 = vunpack.c.h.s8.bf16 %v75
    %v96 = vunpack.c.h.s8.bf16 %v76
    %v97 = vunpack.c.l.s8.bf16 %v77
    %v98 = vunpack.c.l.s8.bf16 %v78
    %v99 = vunpack.c.h.s8.bf16 %v77
    %v100 = vunpack.c.h.s8.bf16 %v78
    %v101 = vunpack.c.l.s8.bf16 %v79
    %v102 = vunpack.c.l.s8.bf16 %v80
    %v103 = vunpack.c.h.s8.bf16 %v79
    %v104 = vunpack.c.h.s8.bf16 %v80
    %v105 = vunpack.c.l.s8.bf16 %v81
    %v106 = vunpack.c.l.s8.bf16 %v82
    %v107 = vunpack.c.h.s8.bf16 %v81
    %v108 = vunpack.c.h.s8.bf16 %v82
    %v109 = vunpack.c.l.s8.bf16 %v83
    %v110 = vunpack.c.l.s8.bf16 %v84
    %v111 = vunpack.c.h.s8.bf16 %v83
    %v112 = vunpack.c.h.s8.bf16 %v84
    %v113 = vunpack.c.l.s8.bf16 %v85
    %v114 = vunpack.c.l.s8.bf16 %v86
    %v115 = vunpack.c.h.s8.bf16 %v85
    %v116 = vunpack.c.h.s8.bf16 %v86
    %v117 = vunpack.c.l.s8.bf16 %v87
    %v118 = vunpack.c.l.s8.bf16 %v88
    %v119 = vunpack.c.h.s8.bf16 %v87
    %v120 = vunpack.c.h.s8.bf16 %v88
    %v121 = vld [vmem:[#allocation5] sm:$0xff]
    %v122 = vld [vmem:[#allocation5 + $0x8] sm:$0xff]
    %v123 = vld [vmem:[#allocation5 + $0x10] sm:$0xff]
    %v124 = vld [vmem:[#allocation5 + $0x18] sm:$0xff]
    %v125 = vld [vmem:[#allocation5 + $0x20] sm:$0xff]
    %v126 = vld [vmem:[#allocation5 + $0x28] sm:$0xff]
    %v127 = vld [vmem:[#allocation5 + $0x30] sm:$0xff]
    %v128 = vld [vmem:[#allocation5 + $0x38] sm:$0xff]
    %v129 = vld [vmem:[#allocation5 + $0x40] sm:$0xff]
    %v130 = vld [vmem:[#allocation5 + $0x48] sm:$0xff]
    %v131 = vld [vmem:[#allocation5 + $0x50] sm:$0xff]
    %v132 = vld [vmem:[#allocation5 + $0x58] sm:$0xff]
    %v133 = vld [vmem:[#allocation5 + $0x60] sm:$0xff]
    %v134 = vld [vmem:[#allocation5 + $0x68] sm:$0xff]
    %v135 = vld [vmem:[#allocation5 + $0x70] sm:$0xff]
    %v136 = vld [vmem:[#allocation5 + $0x78] sm:$0xff]
    %v137 = vld [vmem:[#allocation5 + $0x80] sm:$0xff]
    %v138 = vld [vmem:[#allocation5 + $0x88] sm:$0xff]
    %v139 = vld [vmem:[#allocation5 + $0x90] sm:$0xff]
    %v140 = vld [vmem:[#allocation5 + $0x98] sm:$0xff]
    %v141 = vld [vmem:[#allocation5 + $0xa0] sm:$0xff]
    %v142 = vld [vmem:[#allocation5 + $0xa8] sm:$0xff]
    %v143 = vld [vmem:[#allocation5 + $0xb0] sm:$0xff]
    %v144 = vld [vmem:[#allocation5 + $0xb8] sm:$0xff]
    %v145 = vld [vmem:[#allocation5 + $0xc0] sm:$0xff]
    %v146 = vld [vmem:[#allocation5 + $0xc8] sm:$0xff]
    %v147 = vld [vmem:[#allocation5 + $0xd0] sm:$0xff]
    %v148 = vld [vmem:[#allocation5 + $0xd8] sm:$0xff]
    %v149 = vld [vmem:[#allocation5 + $0xe0] sm:$0xff]
    %v150 = vld [vmem:[#allocation5 + $0xe8] sm:$0xff]
    %v151 = vld [vmem:[#allocation5 + $0xf0] sm:$0xff]
    %v152 = vld [vmem:[#allocation5 + $0xf8] sm:$0xff]
    %v153 = vpack.c.bf16 %v122, %v121
    %v154 = vpack.c.bf16 %v124, %v123
    %v155 = vpack.c.bf16 %v126, %v125
    %v156 = vpack.c.bf16 %v128, %v127
    %v157 = vpack.c.bf16 %v130, %v129
    %v158 = vpack.c.bf16 %v132, %v131
    %v159 = vpack.c.bf16 %v134, %v133
    %v160 = vpack.c.bf16 %v136, %v135
    %v161 = vpack.c.bf16 %v138, %v137
    %v162 = vpack.c.bf16 %v140, %v139
    %v163 = vpack.c.bf16 %v142, %v141
    %v164 = vpack.c.bf16 %v144, %v143
    %v165 = vpack.c.bf16 %v146, %v145
    %v166 = vpack.c.bf16 %v148, %v147
    %v167 = vpack.c.bf16 %v150, %v149
    %v168 = vpack.c.bf16 %v152, %v151
    %169 = vmatprep.subr.bf16.mxu0 0
    %170 = vmatpush1.bf16.msra.mxu0 %v160
    %171 = vmatprep.subr.bf16.mxu0 0
    %172 = vmatpush1.bf16.msra.mxu0 %v159
    %173 = vmatprep.subr.bf16.mxu0 0
    %174 = vmatpush1.bf16.msra.mxu0 %v158
    %175 = vmatprep.subr.bf16.mxu0 0
    %176 = vmatpush1.bf16.msra.mxu0 %v157
    %177 = vmatprep.subr.bf16.mxu0 0
    %178 = vmatpush1.bf16.msra.mxu0 %v156
    %179 = vmatprep.subr.bf16.mxu0 0
    %180 = vmatpush1.bf16.msra.mxu0 %v155
    %181 = vmatprep.subr.bf16.mxu0 0
    %182 = vmatpush1.bf16.msra.mxu0 %v154
    %183 = vmatprep.subr.bf16.mxu0 0
    %184 = vmatpush1.bf16.msra.mxu0 %v153
    %185 = vmatprep.subr.bf16.mxu0 0
    %186 = vmatpush2.bf16.msra.mxu0 %v168
    %187 = vmatprep.subr.bf16.mxu0 0
    %188 = vmatpush2.bf16.msra.mxu0 %v167
    %189 = vmatprep.subr.bf16.mxu0 0
    %190 = vmatpush2.bf16.msra.mxu0 %v166
    %191 = vmatprep.subr.bf16.mxu0 0
    %192 = vmatpush2.bf16.msra.mxu0 %v165
    %193 = vmatprep.subr.bf16.mxu0 0
    %194 = vmatpush2.bf16.msra.mxu0 %v164
    %195 = vmatprep.subr.bf16.mxu0 0
    %196 = vmatpush2.bf16.msra.mxu0 %v163
    %197 = vmatprep.subr.bf16.mxu0 0
    %198 = vmatpush2.bf16.msra.mxu0 %v162
    %199 = vmatprep.subr.bf16.mxu0 0
    %200 = vmatpush2.bf16.msra.mxu0 %v161
    %201 = vmatprep.mubr.bf16.mxu0 %v90
    %202 = vmatmul.mubr.bf16.gmra.mxu0 %v89
    %v203 = vpop.f32.mrf.mxu0
    %v204 = vadd.f32 0.0, %v203
    %v205 = vpop.f32.mrf.mxu0
    %v206 = vpop.f32.mrf.mxu0
    %v207 = vadd.f32 0.0, %v206
    %v208 = vpop.f32.mrf.mxu0
    %209 = vmatprep.mubr.bf16.mxu0 %v92
    %210 = vmatmul.mubr.bf16.gmra.mxu0 %v91
    %v211 = vpop.f32.mrf.mxu0
    %v212 = vadd.f32 0.0, %v211
    %v213 = vpop.f32.mrf.mxu0
    %v214 = vpop.f32.mrf.mxu0
    %v215 = vadd.f32 0.0, %v214
    %v216 = vpop.f32.mrf.mxu0
    %217 = vmatprep.mubr.bf16.mxu0 %v94
    %218 = vmatmul.mubr.bf16.gmra.mxu0 %v93
    %v219 = vpop.f32.mrf.mxu0
    %v220 = vadd.f32 0.0, %v219
    %v221 = vpop.f32.mrf.mxu0
    %v222 = vpop.f32.mrf.mxu0
    %v223 = vadd.f32 0.0, %v222
    %v224 = vpop.f32.mrf.mxu0
    %225 = vmatprep.mubr.bf16.mxu0 %v96
    %226 = vmatmul.mubr.bf16.gmra.mxu0 %v95
    %v227 = vpop.f32.mrf.mxu0
    %v228 = vadd.f32 0.0, %v227
    %v229 = vpop.f32.mrf.mxu0
    %v230 = vpop.f32.mrf.mxu0
    %v231 = vadd.f32 0.0, %v230
    %v232 = vpop.f32.mrf.mxu0
    %233 = vmatprep.mubr.bf16.mxu0 %v98
    %234 = vmatmul.mubr.bf16.gmra.mxu0 %v97
    %v235 = vpop.f32.mrf.mxu0
    %v236 = vadd.f32 0.0, %v235
    %v237 = vpop.f32.mrf.mxu0
    %v238 = vpop.f32.mrf.mxu0
    %v239 = vadd.f32 0.0, %v238
    %v240 = vpop.f32.mrf.mxu0
    %241 = vmatprep.mubr.bf16.mxu0 %v100
    %242 = vmatmul.mubr.bf16.gmra.mxu0 %v99
    %v243 = vpop.f32.mrf.mxu0
    %v244 = vadd.f32 0.0, %v243
    %v245 = vpop.f32.mrf.mxu0
    %v246 = vpop.f32.mrf.mxu0
    %v247 = vadd.f32 0.0, %v246
    %v248 = vpop.f32.mrf.mxu0
    %249 = vmatprep.mubr.bf16.mxu0 %v102
    %250 = vmatmul.mubr.bf16.gmra.mxu0 %v101
    %v251 = vpop.f32.mrf.mxu0
    %v252 = vadd.f32 0.0, %v251
    %v253 = vpop.f32.mrf.mxu0
    %v254 = vpop.f32.mrf.mxu0
    %v255 = vadd.f32 0.0, %v254
    %v256 = vpop.f32.mrf.mxu0
    %257 = vmatprep.mubr.bf16.mxu0 %v104
    %258 = vmatmul.mubr.bf16.gmra.mxu0 %v103
    %v259 = vpop.f32.mrf.mxu0
    %v260 = vadd.f32 0.0, %v259
    %v261 = vpop.f32.mrf.mxu0
    %v262 = vpop.f32.mrf.mxu0
    %v263 = vadd.f32 0.0, %v262
    %v264 = vpop.f32.mrf.mxu0
    %265 = vmatprep.mubr.bf16.mxu0 %v106
    %266 = vmatmul.mubr.bf16.gmra.mxu0 %v105
    %v267 = vpop.f32.mrf.mxu0
    %v268 = vadd.f32 0.0, %v267
    %v269 = vpop.f32.mrf.mxu0
    %v270 = vpop.f32.mrf.mxu0
    %v271 = vadd.f32 0.0, %v270
    %v272 = vpop.f32.mrf.mxu0
    %273 = vmatprep.mubr.bf16.mxu0 %v108
    %274 = vmatmul.mubr.bf16.gmra.mxu0 %v107
    %v275 = vpop.f32.mrf.mxu0
    %v276 = vadd.f32 0.0, %v275
    %v277 = vpop.f32.mrf.mxu0
    %v278 = vpop.f32.mrf.mxu0
    %v279 = vadd.f32 0.0, %v278
    %v280 = vpop.f32.mrf.mxu0
    %281 = vmatprep.mubr.bf16.mxu0 %v110
    %282 = vmatmul.mubr.bf16.gmra.mxu0 %v109
    %v283 = vpop.f32.mrf.mxu0
    %v284 = vadd.f32 0.0, %v283
    %v285 = vpop.f32.mrf.mxu0
    %v286 = vpop.f32.mrf.mxu0
    %v287 = vadd.f32 0.0, %v286
    %v288 = vpop.f32.mrf.mxu0
    %289 = vmatprep.mubr.bf16.mxu0 %v112
    %290 = vmatmul.mubr.bf16.gmra.mxu0 %v111
    %v291 = vpop.f32.mrf.mxu0
    %v292 = vadd.f32 0.0, %v291
    %v293 = vpop.f32.mrf.mxu0
    %v294 = vpop.f32.mrf.mxu0
    %v295 = vadd.f32 0.0, %v294
    %v296 = vpop.f32.mrf.mxu0
    %297 = vmatprep.mubr.bf16.mxu0 %v114
    %298 = vmatmul.mubr.bf16.gmra.mxu0 %v113
    %v299 = vpop.f32.mrf.mxu0
    %v300 = vadd.f32 0.0, %v299
    %v301 = vpop.f32.mrf.mxu0
    %v302 = vpop.f32.mrf.mxu0
    %v303 = vadd.f32 0.0, %v302
    %v304 = vpop.f32.mrf.mxu0
    %305 = vmatprep.mubr.bf16.mxu0 %v116
    %306 = vmatmul.mubr.bf16.gmra.mxu0 %v115
    %v307 = vpop.f32.mrf.mxu0
    %v308 = vadd.f32 0.0, %v307
    %v309 = vpop.f32.mrf.mxu0
    %v310 = vpop.f32.mrf.mxu0
    %v311 = vadd.f32 0.0, %v310
    %v312 = vpop.f32.mrf.mxu0
    %313 = vmatprep.mubr.bf16.mxu0 %v118
    %314 = vmatmul.mubr.bf16.gmra.mxu0 %v117
    %v315 = vpop.f32.mrf.mxu0
    %v316 = vadd.f32 0.0, %v315
    %v317 = vpop.f32.mrf.mxu0
    %v318 = vpop.f32.mrf.mxu0
    %v319 = vadd.f32 0.0, %v318
    %v320 = vpop.f32.mrf.mxu0
    %321 = vmatprep.mubr.bf16.mxu0 %v120
    %322 = vmatmul.mubr.bf16.gmra.mxu0 %v119
    %v323 = vpop.f32.mrf.mxu0
    %v324 = vadd.f32 0.0, %v323
    %v325 = vpop.f32.mrf.mxu0
    %v326 = vpop.f32.mrf.mxu0
    %v327 = vadd.f32 0.0, %v326
    %v328 = vpop.f32.mrf.mxu0
    %329 = vdwg.mxu0
    %s330 = scalar_lea.vmem [#allocation5], %s72
    %v331 = vld [vmem:[%s330] sm:$0xff]
    %v332 = vld [vmem:[%s330 + $0x8] sm:$0xff]
    %v333 = vld [vmem:[%s330 + $0x10] sm:$0xff]
    %v334 = vld [vmem:[%s330 + $0x18] sm:$0xff]
    %v335 = vld [vmem:[%s330 + $0x20] sm:$0xff]
    %v336 = vld [vmem:[%s330 + $0x28] sm:$0xff]
    %v337 = vld [vmem:[%s330 + $0x30] sm:$0xff]
    %v338 = vld [vmem:[%s330 + $0x38] sm:$0xff]
    %v339 = vld [vmem:[%s330 + $0x40] sm:$0xff]
    %v340 = vld [vmem:[%s330 + $0x48] sm:$0xff]
    %v341 = vld [vmem:[%s330 + $0x50] sm:$0xff]
    %v342 = vld [vmem:[%s330 + $0x58] sm:$0xff]
    %v343 = vld [vmem:[%s330 + $0x60] sm:$0xff]
    %v344 = vld [vmem:[%s330 + $0x68] sm:$0xff]
    %v345 = vld [vmem:[%s330 + $0x70] sm:$0xff]
    %v346 = vld [vmem:[%s330 + $0x78] sm:$0xff]
    %v347 = vld [vmem:[%s330 + $0x80] sm:$0xff]
    %v348 = vld [vmem:[%s330 + $0x88] sm:$0xff]
    %v349 = vld [vmem:[%s330 + $0x90] sm:$0xff]
    %v350 = vld [vmem:[%s330 + $0x98] sm:$0xff]
    %v351 = vld [vmem:[%s330 + $0xa0] sm:$0xff]
    %v352 = vld [vmem:[%s330 + $0xa8] sm:$0xff]
    %v353 = vld [vmem:[%s330 + $0xb0] sm:$0xff]
    %v354 = vld [vmem:[%s330 + $0xb8] sm:$0xff]
    %v355 = vld [vmem:[%s330 + $0xc0] sm:$0xff]
    %v356 = vld [vmem:[%s330 + $0xc8] sm:$0xff]
    %v357 = vld [vmem:[%s330 + $0xd0] sm:$0xff]
    %v358 = vld [vmem:[%s330 + $0xd8] sm:$0xff]
    %v359 = vld [vmem:[%s330 + $0xe0] sm:$0xff]
    %v360 = vld [vmem:[%s330 + $0xe8] sm:$0xff]
    %v361 = vld [vmem:[%s330 + $0xf0] sm:$0xff]
    %v362 = vld [vmem:[%s330 + $0xf8] sm:$0xff]
    %v363 = vadd.f32 %v331, %v204
    %v364 = vadd.f32 %v332, %v207
    %v365 = vadd.f32 %v333, %v212
    %v366 = vadd.f32 %v334, %v215
    %v367 = vadd.f32 %v335, %v220
    %v368 = vadd.f32 %v336, %v223
    %v369 = vadd.f32 %v337, %v228
    %v370 = vadd.f32 %v338, %v231
    %v371 = vadd.f32 %v339, %v236
    %v372 = vadd.f32 %v340, %v239
    %v373 = vadd.f32 %v341, %v244
    %v374 = vadd.f32 %v342, %v247
    %v375 = vadd.f32 %v343, %v252
    %v376 = vadd.f32 %v344, %v255
    %v377 = vadd.f32 %v345, %v260
    %v378 = vadd.f32 %v346, %v263
    %v379 = vadd.f32 %v347, %v268
    %v380 = vadd.f32 %v348, %v271
    %v381 = vadd.f32 %v349, %v276
    %v382 = vadd.f32 %v350, %v279
    %v383 = vadd.f32 %v351, %v284
    %v384 = vadd.f32 %v352, %v287
    %v385 = vadd.f32 %v353, %v292
    %v386 = vadd.f32 %v354, %v295
    %v387 = vadd.f32 %v355, %v300
    %v388 = vadd.f32 %v356, %v303
    %v389 = vadd.f32 %v357, %v308
    %v390 = vadd.f32 %v358, %v311
    %v391 = vadd.f32 %v359, %v316
    %v392 = vadd.f32 %v360, %v319
    %v393 = vadd.f32 %v361, %v324
    %v394 = vadd.f32 %v362, %v327
    %v395 = vld [vmem:[#allocation8] sm:$0xff]
    %v396 = vld [vmem:[#allocation7] sm:$0xf]
    %v397 = vld [vmem:[#allocation7 + $0x4] sm:$0xf]
    %v398 = vld [vmem:[#allocation7 + $0x8] sm:$0xf]
    %v399 = vld [vmem:[#allocation7 + $0xc] sm:$0xf]
    %v400 = vld [vmem:[#allocation7 + $0x10] sm:$0xf]
    %v401 = vld [vmem:[#allocation7 + $0x14] sm:$0xf]
    %v402 = vld [vmem:[#allocation7 + $0x18] sm:$0xf]
    %v403 = vld [vmem:[#allocation7 + $0x1c] sm:$0xf]
    %v404 = vld [vmem:[#allocation7 + $0x20] sm:$0xf]
    %v405 = vld [vmem:[#allocation7 + $0x24] sm:$0xf]
    %v406 = vld [vmem:[#allocation7 + $0x28] sm:$0xf]
    %v407 = vld [vmem:[#allocation7 + $0x2c] sm:$0xf]
    %v408 = vld [vmem:[#allocation7 + $0x30] sm:$0xf]
    %v409 = vld [vmem:[#allocation7 + $0x34] sm:$0xf]
    %v410 = vld [vmem:[#allocation7 + $0x38] sm:$0xf]
    %v411 = vld [vmem:[#allocation7 + $0x3c] sm:$0xf]
    %v412 = vpack.c.bf16 %v364, %v363
    %v413 = vpack.c.bf16 %v366, %v365
    %v414 = vpack.c.bf16 %v368, %v367
    %v415 = vpack.c.bf16 %v370, %v369
    %v416 = vpack.c.bf16 %v372, %v371
    %v417 = vpack.c.bf16 %v374, %v373
    %v418 = vpack.c.bf16 %v376, %v375
    %v419 = vpack.c.bf16 %v378, %v377
    %v420 = vpack.c.bf16 %v380, %v379
    %v421 = vpack.c.bf16 %v382, %v381
    %v422 = vpack.c.bf16 %v384, %v383
    %v423 = vpack.c.bf16 %v386, %v385
    %v424 = vpack.c.bf16 %v388, %v387
    %v425 = vpack.c.bf16 %v390, %v389
    %v426 = vpack.c.bf16 %v392, %v391
    %v427 = vpack.c.bf16 %v394, %v393
    %v428 = vlaneseq
    %v429 = vshrl.u32 %v428, 7
    %v430 = vsub.s32 0, %v429
    %v431 = vrot.slane %v395, %v430
    %v448 = vunpack.c.l.b16 %v396
    %v449 = vunpack.c.l.b16 %v397
    %v450 = vunpack.c.l.b16 %v398
    %v451 = vunpack.c.l.b16 %v399
    %v452 = vunpack.c.l.b16 %v400
    %v453 = vunpack.c.l.b16 %v401
    %v454 = vunpack.c.l.b16 %v402
    %v455 = vunpack.c.l.b16 %v403
    %v456 = vunpack.c.l.b16 %v404
    %v457 = vunpack.c.l.b16 %v405
    %v458 = vunpack.c.l.b16 %v406
    %v459 = vunpack.c.l.b16 %v407
    %v460 = vunpack.c.l.b16 %v408
    %v461 = vunpack.c.l.b16 %v409
    %v462 = vunpack.c.l.b16 %v410
    %v463 = vunpack.c.l.b16 %v411
    %v464 = vpack.c.b16 %v449, %v448
    %v465 = vpack.c.b16 %v451, %v450
    %v466 = vpack.c.b16 %v453, %v452
    %v467 = vpack.c.b16 %v455, %v454
    %v468 = vpack.c.b16 %v457, %v456
    %v469 = vpack.c.b16 %v459, %v458
    %v470 = vpack.c.b16 %v461, %v460
    %v471 = vpack.c.b16 %v463, %v462
    %480 = vmatprep.subr.bf16.mxu0 0
    %481 = vmatpush1.bf16.msra.mxu0 %v471
    %482 = vmatprep.subr.bf16.mxu0 0
    %483 = vmatpush1.bf16.msra.mxu0 %v470
    %484 = vmatprep.subr.bf16.mxu0 0
    %485 = vmatpush1.bf16.msra.mxu0 %v469
    %486 = vmatprep.subr.bf16.mxu0 0
    %487 = vmatpush1.bf16.msra.mxu0 %v468
    %488 = vmatprep.subr.bf16.mxu0 0
    %489 = vmatpush1.bf16.msra.mxu0 %v467
    %490 = vmatprep.subr.bf16.mxu0 0
    %491 = vmatpush1.bf16.msra.mxu0 %v466
    %492 = vmatprep.subr.bf16.mxu0 0
    %493 = vmatpush1.bf16.msra.mxu0 %v465
    %494 = vmatprep.subr.bf16.mxu0 0
    %495 = vmatpush1.bf16.msra.mxu0 %v464
    %496 = vmatprep.subr.bf16.mxu0 0
    %497 = vmatpush2.bf16.msra.mxu0 0
    %498 = vmatprep.subr.bf16.mxu0 0
    %499 = vmatpush2.bf16.msra.mxu0 0
    %500 = vmatprep.subr.bf16.mxu0 0
    %501 = vmatpush2.bf16.msra.mxu0 0
    %502 = vmatprep.subr.bf16.mxu0 0
    %503 = vmatpush2.bf16.msra.mxu0 0
    %504 = vmatprep.subr.bf16.mxu0 0
    %505 = vmatpush2.bf16.msra.mxu0 0
    %506 = vmatprep.subr.bf16.mxu0 0
    %507 = vmatpush2.bf16.msra.mxu0 0
    %508 = vmatprep.subr.bf16.mxu0 0
    %509 = vmatpush2.bf16.msra.mxu0 0
    %510 = vmatprep.subr.bf16.mxu0 0
    %511 = vmatpush2.bf16.msra.mxu0 0
    %512 = vmatprep.mubr.bf16.mxu0 0
    %513 = vmatmul.mubr.bf16.gmra.mxu0 %v412
    %v514 = vpop.f32.mrf.mxu0
    %v515 = vadd.f32 %v431, %v514
    %v516 = vpop.f32.mrf.mxu0
    %v517 = vpop.f32.mrf.mxu0
    %v518 = vadd.f32 %v431, %v517
    %v519 = vpop.f32.mrf.mxu0
    %520 = vmatprep.mubr.bf16.mxu0 0
    %521 = vmatmul.mubr.bf16.gmra.mxu0 %v413
    %v522 = vpop.f32.mrf.mxu0
    %v523 = vadd.f32 %v431, %v522
    %v524 = vpop.f32.mrf.mxu0
    %v525 = vpop.f32.mrf.mxu0
    %v526 = vadd.f32 %v431, %v525
    %v527 = vpop.f32.mrf.mxu0
    %528 = vmatprep.mubr.bf16.mxu0 0
    %529 = vmatmul.mubr.bf16.gmra.mxu0 %v414
    %v530 = vpop.f32.mrf.mxu0
    %v531 = vadd.f32 %v431, %v530
    %v532 = vpop.f32.mrf.mxu0
    %v533 = vpop.f32.mrf.mxu0
    %v534 = vadd.f32 %v431, %v533
    %v535 = vpop.f32.mrf.mxu0
    %536 = vmatprep.mubr.bf16.mxu0 0
    %537 = vmatmul.mubr.bf16.gmra.mxu0 %v415
    %v538 = vpop.f32.mrf.mxu0
    %v539 = vadd.f32 %v431, %v538
    %v540 = vpop.f32.mrf.mxu0
    %v541 = vpop.f32.mrf.mxu0
    %v542 = vadd.f32 %v431, %v541
    %v543 = vpop.f32.mrf.mxu0
    %544 = vmatprep.mubr.bf16.mxu0 0
    %545 = vmatmul.mubr.bf16.gmra.mxu0 %v416
    %v546 = vpop.f32.mrf.mxu0
    %v547 = vadd.f32 %v431, %v546
    %v548 = vpop.f32.mrf.mxu0
    %v549 = vpop.f32.mrf.mxu0
    %v550 = vadd.f32 %v431, %v549
    %v551 = vpop.f32.mrf.mxu0
    %552 = vmatprep.mubr.bf16.mxu0 0
    %553 = vmatmul.mubr.bf16.gmra.mxu0 %v417
    %v554 = vpop.f32.mrf.mxu0
    %v555 = vadd.f32 %v431, %v554
    %v556 = vpop.f32.mrf.mxu0
    %v557 = vpop.f32.mrf.mxu0
    %v558 = vadd.f32 %v431, %v557
    %v559 = vpop.f32.mrf.mxu0
    %560 = vmatprep.mubr.bf16.mxu0 0
    %561 = vmatmul.mubr.bf16.gmra.mxu0 %v418
    %v562 = vpop.f32.mrf.mxu0
    %v563 = vadd.f32 %v431, %v562
    %v564 = vpop.f32.mrf.mxu0
    %v565 = vpop.f32.mrf.mxu0
    %v566 = vadd.f32 %v431, %v565
    %v567 = vpop.f32.mrf.mxu0
    %568 = vmatprep.mubr.bf16.mxu0 0
    %569 = vmatmul.mubr.bf16.gmra.mxu0 %v419
    %v570 = vpop.f32.mrf.mxu0
    %v571 = vadd.f32 %v431, %v570
    %v572 = vpop.f32.mrf.mxu0
    %v573 = vpop.f32.mrf.mxu0
    %v574 = vadd.f32 %v431, %v573
    %v575 = vpop.f32.mrf.mxu0
    %576 = vmatprep.mubr.bf16.mxu0 0
    %577 = vmatmul.mubr.bf16.gmra.mxu0 %v420
    %v578 = vpop.f32.mrf.mxu0
    %v579 = vadd.f32 %v431, %v578
    %v580 = vpop.f32.mrf.mxu0
    %v581 = vpop.f32.mrf.mxu0
    %v582 = vadd.f32 %v431, %v581
    %v583 = vpop.f32.mrf.mxu0
    %584 = vmatprep.mubr.bf16.mxu0 0
    %585 = vmatmul.mubr.bf16.gmra.mxu0 %v421
    %v586 = vpop.f32.mrf.mxu0
    %v587 = vadd.f32 %v431, %v586
    %v588 = vpop.f32.mrf.mxu0
    %v589 = vpop.f32.mrf.mxu0
    %v590 = vadd.f32 %v431, %v589
    %v591 = vpop.f32.mrf.mxu0
    %592 = vmatprep.mubr.bf16.mxu0 0
    %593 = vmatmul.mubr.bf16.gmra.mxu0 %v422
    %v594 = vpop.f32.mrf.mxu0
    %v595 = vadd.f32 %v431, %v594
    %v596 = vpop.f32.mrf.mxu0
    %v597 = vpop.f32.mrf.mxu0
    %v598 = vadd.f32 %v431, %v597
    %v599 = vpop.f32.mrf.mxu0
    %600 = vmatprep.mubr.bf16.mxu0 0
    %601 = vmatmul.mubr.bf16.gmra.mxu0 %v423
    %v602 = vpop.f32.mrf.mxu0
    %v603 = vadd.f32 %v431, %v602
    %v604 = vpop.f32.mrf.mxu0
    %v605 = vpop.f32.mrf.mxu0
    %v606 = vadd.f32 %v431, %v605
    %v607 = vpop.f32.mrf.mxu0
    %608 = vmatprep.mubr.bf16.mxu0 0
    %609 = vmatmul.mubr.bf16.gmra.mxu0 %v424
    %v610 = vpop.f32.mrf.mxu0
    %v611 = vadd.f32 %v431, %v610
    %v612 = vpop.f32.mrf.mxu0
    %v613 = vpop.f32.mrf.mxu0
    %v614 = vadd.f32 %v431, %v613
    %v615 = vpop.f32.mrf.mxu0
    %616 = vmatprep.mubr.bf16.mxu0 0
    %617 = vmatmul.mubr.bf16.gmra.mxu0 %v425
    %v618 = vpop.f32.mrf.mxu0
    %v619 = vadd.f32 %v431, %v618
    %v620 = vpop.f32.mrf.mxu0
    %v621 = vpop.f32.mrf.mxu0
    %v622 = vadd.f32 %v431, %v621
    %v623 = vpop.f32.mrf.mxu0
    %624 = vmatprep.mubr.bf16.mxu0 0
    %625 = vmatmul.mubr.bf16.gmra.mxu0 %v426
    %v626 = vpop.f32.mrf.mxu0
    %v627 = vadd.f32 %v431, %v626
    %v628 = vpop.f32.mrf.mxu0
    %v629 = vpop.f32.mrf.mxu0
    %v630 = vadd.f32 %v431, %v629
    %v631 = vpop.f32.mrf.mxu0
    %632 = vmatprep.mubr.bf16.mxu0 0
    %633 = vmatmul.mubr.bf16.gmra.mxu0 %v427
    %v634 = vpop.f32.mrf.mxu0
    %v635 = vadd.f32 %v431, %v634
    %v636 = vpop.f32.mrf.mxu0
    %v637 = vpop.f32.mrf.mxu0
    %v638 = vadd.f32 %v431, %v637
    %v639 = vpop.f32.mrf.mxu0
    %640 = vdwg.mxu0
    %v641 = vmax.f32 %v515, 0.0
    %v642 = vmax.f32 %v518, 0.0
    %v643 = vmax.f32 %v523, 0.0
    %v644 = vmax.f32 %v526, 0.0
    %v645 = vmax.f32 %v531, 0.0
    %v646 = vmax.f32 %v534, 0.0
    %v647 = vmax.f32 %v539, 0.0
    %v648 = vmax.f32 %v542, 0.0
    %v649 = vmax.f32 %v547, 0.0
    %v650 = vmax.f32 %v550, 0.0
    %v651 = vmax.f32 %v555, 0.0
    %v652 = vmax.f32 %v558, 0.0
    %v653 = vmax.f32 %v563, 0.0
    %v654 = vmax.f32 %v566, 0.0
    %v655 = vmax.f32 %v571, 0.0
    %v656 = vmax.f32 %v574, 0.0
    %v657 = vmax.f32 %v579, 0.0
    %v658 = vmax.f32 %v582, 0.0
    %v659 = vmax.f32 %v587, 0.0
    %v660 = vmax.f32 %v590, 0.0
    %v661 = vmax.f32 %v595, 0.0
    %v662 = vmax.f32 %v598, 0.0
    %v663 = vmax.f32 %v603, 0.0
    %v664 = vmax.f32 %v606, 0.0
    %v665 = vmax.f32 %v611, 0.0
    %v666 = vmax.f32 %v614, 0.0
    %v667 = vmax.f32 %v619, 0.0
    %v668 = vmax.f32 %v622, 0.0
    %v669 = vmax.f32 %v627, 0.0
    %v670 = vmax.f32 %v630, 0.0
    %v671 = vmax.f32 %v635, 0.0
    %v672 = vmax.f32 %v638, 0.0
    %v673 = vld [vmem:[#allocation7 + $0x40] sm:$0xf]
    %v674 = vld [vmem:[#allocation7 + $0x44] sm:$0xf]
    %v675 = vld [vmem:[#allocation7 + $0x48] sm:$0xf]
    %v676 = vld [vmem:[#allocation7 + $0x4c] sm:$0xf]
    %v677 = vld [vmem:[#allocation7 + $0x50] sm:$0xf]
    %v678 = vld [vmem:[#allocation7 + $0x54] sm:$0xf]
    %v679 = vld [vmem:[#allocation7 + $0x58] sm:$0xf]
    %v680 = vld [vmem:[#allocation7 + $0x5c] sm:$0xf]
    %v681 = vld [vmem:[#allocation7 + $0x60] sm:$0xf]
    %v682 = vld [vmem:[#allocation7 + $0x64] sm:$0xf]
    %v683 = vld [vmem:[#allocation7 + $0x68] sm:$0xf]
    %v684 = vld [vmem:[#allocation7 + $0x6c] sm:$0xf]
    %v685 = vld [vmem:[#allocation7 + $0x70] sm:$0xf]
    %v686 = vld [vmem:[#allocation7 + $0x74] sm:$0xf]
    %v687 = vld [vmem:[#allocation7 + $0x78] sm:$0xf]
    %v688 = vld [vmem:[#allocation7 + $0x7c] sm:$0xf]
    %v689 = vpack.c.bf16 %v642, %v641
    %v690 = vpack.c.bf16 %v644, %v643
    %v691 = vpack.c.bf16 %v646, %v645
    %v692 = vpack.c.bf16 %v648, %v647
    %v693 = vpack.c.bf16 %v650, %v649
    %v694 = vpack.c.bf16 %v652, %v651
    %v695 = vpack.c.bf16 %v654, %v653
    %v696 = vpack.c.bf16 %v656, %v655
    %v697 = vpack.c.bf16 %v658, %v657
    %v698 = vpack.c.bf16 %v660, %v659
    %v699 = vpack.c.bf16 %v662, %v661
    %v700 = vpack.c.bf16 %v664, %v663
    %v701 = vpack.c.bf16 %v666, %v665
    %v702 = vpack.c.bf16 %v668, %v667
    %v703 = vpack.c.bf16 %v670, %v669
    %v704 = vpack.c.bf16 %v672, %v671
    %v705 = vlaneseq
    %v706 = vshrl.u32 %v705, 7
    %v707 = vsub.s32 1, %v706
    %v708 = vrot.slane %v395, %v707
    %v725 = vunpack.c.l.b16 %v673
    %v726 = vunpack.c.l.b16 %v674
    %v727 = vunpack.c.l.b16 %v675
    %v728 = vunpack.c.l.b16 %v676
    %v729 = vunpack.c.l.b16 %v677
    %v730 = vunpack.c.l.b16 %v678
    %v731 = vunpack.c.l.b16 %v679
    %v732 = vunpack.c.l.b16 %v680
    %v733 = vunpack.c.l.b16 %v681
    %v734 = vunpack.c.l.b16 %v682
    %v735 = vunpack.c.l.b16 %v683
    %v736 = vunpack.c.l.b16 %v684
    %v737 = vunpack.c.l.b16 %v685
    %v738 = vunpack.c.l.b16 %v686
    %v739 = vunpack.c.l.b16 %v687
    %v740 = vunpack.c.l.b16 %v688
    %v741 = vpack.c.b16 %v726, %v725
    %v742 = vpack.c.b16 %v728, %v727
    %v743 = vpack.c.b16 %v730, %v729
    %v744 = vpack.c.b16 %v732, %v731
    %v745 = vpack.c.b16 %v734, %v733
    %v746 = vpack.c.b16 %v736, %v735
    %v747 = vpack.c.b16 %v738, %v737
    %v748 = vpack.c.b16 %v740, %v739
    %757 = vmatprep.subr.bf16.mxu0 0
    %758 = vmatpush1.bf16.msra.mxu0 %v748
    %759 = vmatprep.subr.bf16.mxu0 0
    %760 = vmatpush1.bf16.msra.mxu0 %v747
    %761 = vmatprep.subr.bf16.mxu0 0
    %762 = vmatpush1.bf16.msra.mxu0 %v746
    %763 = vmatprep.subr.bf16.mxu0 0
    %764 = vmatpush1.bf16.msra.mxu0 %v745
    %765 = vmatprep.subr.bf16.mxu0 0
    %766 = vmatpush1.bf16.msra.mxu0 %v744
    %767 = vmatprep.subr.bf16.mxu0 0
    %768 = vmatpush1.bf16.msra.mxu0 %v743
    %769 = vmatprep.subr.bf16.mxu0 0
    %770 = vmatpush1.bf16.msra.mxu0 %v742
    %771 = vmatprep.subr.bf16.mxu0 0
    %772 = vmatpush1.bf16.msra.mxu0 %v741
    %773 = vmatprep.subr.bf16.mxu0 0
    %774 = vmatpush2.bf16.msra.mxu0 0
    %775 = vmatprep.subr.bf16.mxu0 0
    %776 = vmatpush2.bf16.msra.mxu0 0
    %777 = vmatprep.subr.bf16.mxu0 0
    %778 = vmatpush2.bf16.msra.mxu0 0
    %779 = vmatprep.subr.bf16.mxu0 0
    %780 = vmatpush2.bf16.msra.mxu0 0
    %781 = vmatprep.subr.bf16.mxu0 0
    %782 = vmatpush2.bf16.msra.mxu0 0
    %783 = vmatprep.subr.bf16.mxu0 0
    %784 = vmatpush2.bf16.msra.mxu0 0
    %785 = vmatprep.subr.bf16.mxu0 0
    %786 = vmatpush2.bf16.msra.mxu0 0
    %787 = vmatprep.subr.bf16.mxu0 0
    %788 = vmatpush2.bf16.msra.mxu0 0
    %789 = vmatprep.mubr.bf16.mxu0 0
    %790 = vmatmul.mubr.bf16.gmra.mxu0 %v689
    %v791 = vpop.f32.mrf.mxu0
    %v792 = vadd.f32 %v708, %v791
    %v793 = vpop.f32.mrf.mxu0
    %v794 = vpop.f32.mrf.mxu0
    %v795 = vadd.f32 %v708, %v794
    %v796 = vpop.f32.mrf.mxu0
    %797 = vmatprep.mubr.bf16.mxu0 0
    %798 = vmatmul.mubr.bf16.gmra.mxu0 %v690
    %v799 = vpop.f32.mrf.mxu0
    %v800 = vadd.f32 %v708, %v799
    %v801 = vpop.f32.mrf.mxu0
    %v802 = vpop.f32.mrf.mxu0
    %v803 = vadd.f32 %v708, %v802
    %v804 = vpop.f32.mrf.mxu0
    %805 = vmatprep.mubr.bf16.mxu0 0
    %806 = vmatmul.mubr.bf16.gmra.mxu0 %v691
    %v807 = vpop.f32.mrf.mxu0
    %v808 = vadd.f32 %v708, %v807
    %v809 = vpop.f32.mrf.mxu0
    %v810 = vpop.f32.mrf.mxu0
    %v811 = vadd.f32 %v708, %v810
    %v812 = vpop.f32.mrf.mxu0
    %813 = vmatprep.mubr.bf16.mxu0 0
    %814 = vmatmul.mubr.bf16.gmra.mxu0 %v692
    %v815 = vpop.f32.mrf.mxu0
    %v816 = vadd.f32 %v708, %v815
    %v817 = vpop.f32.mrf.mxu0
    %v818 = vpop.f32.mrf.mxu0
    %v819 = vadd.f32 %v708, %v818
    %v820 = vpop.f32.mrf.mxu0
    %821 = vmatprep.mubr.bf16.mxu0 0
    %822 = vmatmul.mubr.bf16.gmra.mxu0 %v693
    %v823 = vpop.f32.mrf.mxu0
    %v824 = vadd.f32 %v708, %v823
    %v825 = vpop.f32.mrf.mxu0
    %v826 = vpop.f32.mrf.mxu0
    %v827 = vadd.f32 %v708, %v826
    %v828 = vpop.f32.mrf.mxu0
    %829 = vmatprep.mubr.bf16.mxu0 0
    %830 = vmatmul.mubr.bf16.gmra.mxu0 %v694
    %v831 = vpop.f32.mrf.mxu0
    %v832 = vadd.f32 %v708, %v831
    %v833 = vpop.f32.mrf.mxu0
    %v834 = vpop.f32.mrf.mxu0
    %v835 = vadd.f32 %v708, %v834
    %v836 = vpop.f32.mrf.mxu0
    %837 = vmatprep.mubr.bf16.mxu0 0
    %838 = vmatmul.mubr.bf16.gmra.mxu0 %v695
    %v839 = vpop.f32.mrf.mxu0
    %v840 = vadd.f32 %v708, %v839
    %v841 = vpop.f32.mrf.mxu0
    %v842 = vpop.f32.mrf.mxu0
    %v843 = vadd.f32 %v708, %v842
    %v844 = vpop.f32.mrf.mxu0
    %845 = vmatprep.mubr.bf16.mxu0 0
    %846 = vmatmul.mubr.bf16.gmra.mxu0 %v696
    %v847 = vpop.f32.mrf.mxu0
    %v848 = vadd.f32 %v708, %v847
    %v849 = vpop.f32.mrf.mxu0
    %v850 = vpop.f32.mrf.mxu0
    %v851 = vadd.f32 %v708, %v850
    %v852 = vpop.f32.mrf.mxu0
    %853 = vmatprep.mubr.bf16.mxu0 0
    %854 = vmatmul.mubr.bf16.gmra.mxu0 %v697
    %v855 = vpop.f32.mrf.mxu0
    %v856 = vadd.f32 %v708, %v855
    %v857 = vpop.f32.mrf.mxu0
    %v858 = vpop.f32.mrf.mxu0
    %v859 = vadd.f32 %v708, %v858
    %v860 = vpop.f32.mrf.mxu0
    %861 = vmatprep.mubr.bf16.mxu0 0
    %862 = vmatmul.mubr.bf16.gmra.mxu0 %v698
    %v863 = vpop.f32.mrf.mxu0
    %v864 = vadd.f32 %v708, %v863
    %v865 = vpop.f32.mrf.mxu0
    %v866 = vpop.f32.mrf.mxu0
    %v867 = vadd.f32 %v708, %v866
    %v868 = vpop.f32.mrf.mxu0
    %869 = vmatprep.mubr.bf16.mxu0 0
    %870 = vmatmul.mubr.bf16.gmra.mxu0 %v699
    %v871 = vpop.f32.mrf.mxu0
    %v872 = vadd.f32 %v708, %v871
    %v873 = vpop.f32.mrf.mxu0
    %v874 = vpop.f32.mrf.mxu0
    %v875 = vadd.f32 %v708, %v874
    %v876 = vpop.f32.mrf.mxu0
    %877 = vmatprep.mubr.bf16.mxu0 0
    %878 = vmatmul.mubr.bf16.gmra.mxu0 %v700
    %v879 = vpop.f32.mrf.mxu0
    %v880 = vadd.f32 %v708, %v879
    %v881 = vpop.f32.mrf.mxu0
    %v882 = vpop.f32.mrf.mxu0
    %v883 = vadd.f32 %v708, %v882
    %v884 = vpop.f32.mrf.mxu0
    %885 = vmatprep.mubr.bf16.mxu0 0
    %886 = vmatmul.mubr.bf16.gmra.mxu0 %v701
    %v887 = vpop.f32.mrf.mxu0
    %v888 = vadd.f32 %v708, %v887
    %v889 = vpop.f32.mrf.mxu0
    %v890 = vpop.f32.mrf.mxu0
    %v891 = vadd.f32 %v708, %v890
    %v892 = vpop.f32.mrf.mxu0
    %893 = vmatprep.mubr.bf16.mxu0 0
    %894 = vmatmul.mubr.bf16.gmra.mxu0 %v702
    %v895 = vpop.f32.mrf.mxu0
    %v896 = vadd.f32 %v708, %v895
    %v897 = vpop.f32.mrf.mxu0
    %v898 = vpop.f32.mrf.mxu0
    %v899 = vadd.f32 %v708, %v898
    %v900 = vpop.f32.mrf.mxu0
    %901 = vmatprep.mubr.bf16.mxu0 0
    %902 = vmatmul.mubr.bf16.gmra.mxu0 %v703
    %v903 = vpop.f32.mrf.mxu0
    %v904 = vadd.f32 %v708, %v903
    %v905 = vpop.f32.mrf.mxu0
    %v906 = vpop.f32.mrf.mxu0
    %v907 = vadd.f32 %v708, %v906
    %v908 = vpop.f32.mrf.mxu0
    %909 = vmatprep.mubr.bf16.mxu0 0
    %910 = vmatmul.mubr.bf16.gmra.mxu0 %v704
    %v911 = vpop.f32.mrf.mxu0
    %v912 = vadd.f32 %v708, %v911
    %v913 = vpop.f32.mrf.mxu0
    %v914 = vpop.f32.mrf.mxu0
    %v915 = vadd.f32 %v708, %v914
    %v916 = vpop.f32.mrf.mxu0
    %917 = vdwg.mxu0
    %918 = vst [vmem:[#allocation10] sm:$0xff] %v792
    %919 = vst [vmem:[#allocation10 + $0x8] sm:$0xff] %v795
    %920 = vst [vmem:[#allocation10 + $0x10] sm:$0xff] %v800
    %921 = vst [vmem:[#allocation10 + $0x18] sm:$0xff] %v803
    %922 = vst [vmem:[#allocation10 + $0x20] sm:$0xff] %v808
    %923 = vst [vmem:[#allocation10 + $0x28] sm:$0xff] %v811
    %924 = vst [vmem:[#allocation10 + $0x30] sm:$0xff] %v816
    %925 = vst [vmem:[#allocation10 + $0x38] sm:$0xff] %v819
    %926 = vst [vmem:[#allocation10 + $0x40] sm:$0xff] %v824
    %927 = vst [vmem:[#allocation10 + $0x48] sm:$0xff] %v827
    %928 = vst [vmem:[#allocation10 + $0x50] sm:$0xff] %v832
    %929 = vst [vmem:[#allocation10 + $0x58] sm:$0xff] %v835
    %930 = vst [vmem:[#allocation10 + $0x60] sm:$0xff] %v840
    %931 = vst [vmem:[#allocation10 + $0x68] sm:$0xff] %v843
    %932 = vst [vmem:[#allocation10 + $0x70] sm:$0xff] %v848
    %933 = vst [vmem:[#allocation10 + $0x78] sm:$0xff] %v851
    %934 = vst [vmem:[#allocation10 + $0x80] sm:$0xff] %v856
    %935 = vst [vmem:[#allocation10 + $0x88] sm:$0xff] %v859
    %936 = vst [vmem:[#allocation10 + $0x90] sm:$0xff] %v864
    %937 = vst [vmem:[#allocation10 + $0x98] sm:$0xff] %v867
    %938 = vst [vmem:[#allocation10 + $0xa0] sm:$0xff] %v872
    %939 = vst [vmem:[#allocation10 + $0xa8] sm:$0xff] %v875
    %940 = vst [vmem:[#allocation10 + $0xb0] sm:$0xff] %v880
    %941 = vst [vmem:[#allocation10 + $0xb8] sm:$0xff] %v883
    %942 = vst [vmem:[#allocation10 + $0xc0] sm:$0xff] %v888
    %943 = vst [vmem:[#allocation10 + $0xc8] sm:$0xff] %v891
    %944 = vst [vmem:[#allocation10 + $0xd0] sm:$0xff] %v896
    %945 = vst [vmem:[#allocation10 + $0xd8] sm:$0xff] %v899
    %946 = vst [vmem:[#allocation10 + $0xe0] sm:$0xff] %v904
    %947 = vst [vmem:[#allocation10 + $0xe8] sm:$0xff] %v907
    %948 = vst [vmem:[#allocation10 + $0xf0] sm:$0xff] %v912
    %949 = vst [vmem:[#allocation10 + $0xf8] sm:$0xff] %v915
    // Predicated region
    $region34: #{tpu_custom_call.1} parent=1 // pred_check
      _
    $region35: #{tpu_custom_call.1} parent=1 // pred_check_branch
      %951 = sbr.rel (0) target = $region37
    $region36: #{tpu_custom_call.1} parent=1 // pred_region
      %s953 = ssub.s32 4096, 4096
      %954 = vsyncadd [#allocation4], %s953
      %s955 = sshll.u32 [#allocation10], 4
      %s956 = int_to_ptr.vmem [resolvable:$true] %s955
      %961 = dma.vmem_to_hbm [thread:$0]  %s956, 4096, %s4, [#allocation4], 128, 128, 8
    $region37: #{tpu_custom_call.1} parent=1 // pred_fallthru
      _
    // Predicated region
    $region38: #{tpu_custom_call.1} parent=1 // pred_check
      _
    $region39: #{tpu_custom_call.1} parent=1 // pred_check_branch
      %963 = sbr.rel (0) target = $region41
    $region40: #{tpu_custom_call.1} parent=1 // pred_region
      %964 = dma.done [#allocation4], 4096
    $region41: #{tpu_custom_call.1} parent=1 // pred_fallthru
      _
    %965 = vsyncpa [#allocation3], 1
    %966 = vsyncpa [#allocation6], 1
    %967 = vsyncpa [#allocation9], 1
    %968 = vsyncpa [#allocation4], 1

</llo_original>
